<compile_context>
chip_gen: v6e
topology: v6e:2x2x1
jax: 0.10.0
libtpu: 0.0.40
codegen_flags: <defaults>
</compile_context>

<pallas_src>
import math

import jax
import jax.numpy as jnp
from jax.experimental import pallas as pl
from jax.experimental.pallas import tpu as pltpu


def _expand_kernel(x_ref, o_ref, sem):
    # x_ref: (B, D) raw HBM ref
    # o_ref: (meta_batch_size, group, D) raw HBM ref
    # sem:   (meta_batch_size,) DMA semaphores
    meta_batch_size, group, _ = o_ref.shape
    copies = [
        pltpu.make_async_copy(
            x_ref.at[pl.ds(i * group, group), :],  # contiguous row block of src
            o_ref.at[i],                            # contiguous group slab of dst
            sem.at[i],
        )
        for i in range(meta_batch_size)
    ]
    # Issue every DMA first so they overlap, then wait for all of them.
    for c in copies:
        c.start()
    for c in copies:
        c.wait()


def expand_meta_batch_reference(x, meta_batch_size):
    """What you should actually use in a model: zero-cost metadata reshape."""
    return x.reshape(meta_batch_size, -1, *x.shape[1:])


def expand_meta_batch(x, meta_batch_size):
    """Pallas implementation of ExpandMetaBatch.forward.

    x: (B, *trailing) -> (meta_batch_size, B // meta_batch_size, *trailing)
    """
    B = x.shape[0]
    assert B % meta_batch_size == 0, "meta_batch_size must divide the batch size"
    group = B // meta_batch_size
    trailing = x.shape[1:]
    D = math.prod(trailing) if trailing else 1

    # Glue (metadata-only): flatten trailing dims so the kernel sees a 2D slab.
    x2d = x.reshape(B, D)
    itemsize = jnp.dtype(x.dtype).itemsize

    out3d = pl.pallas_call(
        _expand_kernel,
        out_shape=jax.ShapeDtypeStruct((meta_batch_size, group, D), x.dtype),
        # Keep both operands in HBM; the kernel DMAs directly HBM->HBM.
        in_specs=[pl.BlockSpec(memory_space=pl.ANY)],
        out_specs=pl.BlockSpec(memory_space=pl.ANY),
        scratch_shapes=[pltpu.SemaphoreType.DMA((meta_batch_size,))],
        # Pure-bandwidth op: tell XLA how much HBM traffic this custom call does.
        cost_estimate=pl.CostEstimate(
            flops=0,
            transcendentals=0,
            bytes_accessed=2 * B * D * itemsize,
        ),
    )(x2d)

    # Glue (metadata-only): restore the trailing dims.
    return out3d.reshape(meta_batch_size, group, *trailing)


if __name__ == "__main__":
    key = jax.random.PRNGKey(0)

    # Small shapes consistent with the module: B = meta_batch_size * inner.
    meta_batch_size = 2
    B, C, H, W = 16, 4, 16, 16
    x = jax.random.normal(key, (B, C, H, W), dtype=jnp.float32)

    out = expand_meta_batch(x, meta_batch_size)
    out = jax.block_until_ready(out)

    ref = expand_meta_batch_reference(x, meta_batch_size)
    assert out.shape == (meta_batch_size, B // meta_batch_size, C, H, W), out.shape
    assert out.dtype == x.dtype
    assert jnp.array_equal(out, ref), "mismatch vs reference reshape"

    # Second check: a group size that is NOT a multiple of 8 (the old BlockSpec
    # version could not lower this; the DMA version handles it fine).
    key2 = jax.random.PRNGKey(1)
    x_odd = jax.random.normal(key2, (6, 4, 16, 16), dtype=jnp.float32)  # group = 3
    out_odd = jax.block_until_ready(expand_meta_batch(x_odd, 2))
    ref_odd = expand_meta_batch_reference(x_odd, 2)
    assert out_odd.shape == ref_odd.shape
    assert jnp.array_equal(out_odd, ref_odd), "mismatch vs reference (odd group)"

    print("KERNEL_OK")
</pallas_src>

<mosaic_0001>
module attributes {stable_mosaic.version = 11 : i64} {
  func.func @_expand_kernel(%arg0: memref<16x1024xf32, #tpu.memory_space<any>>, %arg1: memref<2x8x1024xf32, #tpu.memory_space<any>>, %arg2: memref<2x!tpu.dma_semaphore, #tpu.memory_space<semaphore_mem>>) attributes {dimension_semantics = [], scalar_prefetch = 0 : i64, scratch_operands = 1 : i64, tpu.core_type = #tpu.core_type<tc>} {
    %c0_i32 = arith.constant 0 : i32
    %c0_i32_0 = arith.constant 0 : i32
    %c0_i32_1 = arith.constant 0 : i32
    %c0_i32_2 = arith.constant 0 : i32
    %0 = tpu.memref_slice %arg0[%c0_i32_1, %c0_i32_2] : memref<16x1024xf32, #tpu.memory_space<any>> -> memref<8x1024xf32, #tpu.memory_space<any>>
    %c0_i32_3 = arith.constant 0 : i32
    %c0_i32_4 = arith.constant 0 : i32
    %1 = tpu.memref_slice %arg1[%c0_i32, %c0_i32_3, %c0_i32_4] : memref<2x8x1024xf32, #tpu.memory_space<any>> -> memref<1x8x1024xf32, #tpu.memory_space<any>>
    %2 = tpu.memref_squeeze %1 : memref<1x8x1024xf32, #tpu.memory_space<any>> -> memref<8x1024xf32, #tpu.memory_space<any>>
    %3 = tpu.memref_slice %arg2[%c0_i32_0] : memref<2x!tpu.dma_semaphore, #tpu.memory_space<semaphore_mem>> -> memref<1x!tpu.dma_semaphore, #tpu.memory_space<semaphore_mem>>
    %4 = tpu.memref_squeeze %3 : memref<1x!tpu.dma_semaphore, #tpu.memory_space<semaphore_mem>> -> memref<!tpu.dma_semaphore, #tpu.memory_space<semaphore_mem>>
    tpu.enqueue_dma source(%0 : memref<8x1024xf32, #tpu.memory_space<any>>) target(%2 : memref<8x1024xf32, #tpu.memory_space<any>>) target_semaphore(%4 : memref<!tpu.dma_semaphore, #tpu.memory_space<semaphore_mem>>)
    %c1_i32 = arith.constant 1 : i32
    %c1_i32_5 = arith.constant 1 : i32
    %c8_i32 = arith.constant 8 : i32
    %c0_i32_6 = arith.constant 0 : i32
    %5 = tpu.memref_slice %arg0[%c8_i32, %c0_i32_6] : memref<16x1024xf32, #tpu.memory_space<any>> -> memref<8x1024xf32, #tpu.memory_space<any>>
    %c0_i32_7 = arith.constant 0 : i32
    %c0_i32_8 = arith.constant 0 : i32
    %6 = tpu.memref_slice %arg1[%c1_i32, %c0_i32_7, %c0_i32_8] : memref<2x8x1024xf32, #tpu.memory_space<any>> -> memref<1x8x1024xf32, #tpu.memory_space<any>>
    %7 = tpu.memref_squeeze %6 : memref<1x8x1024xf32, #tpu.memory_space<any>> -> memref<8x1024xf32, #tpu.memory_space<any>>
    %8 = tpu.memref_slice %arg2[%c1_i32_5] : memref<2x!tpu.dma_semaphore, #tpu.memory_space<semaphore_mem>> -> memref<1x!tpu.dma_semaphore, #tpu.memory_space<semaphore_mem>>
    %9 = tpu.memref_squeeze %8 : memref<1x!tpu.dma_semaphore, #tpu.memory_space<semaphore_mem>> -> memref<!tpu.dma_semaphore, #tpu.memory_space<semaphore_mem>>
    tpu.enqueue_dma source(%5 : memref<8x1024xf32, #tpu.memory_space<any>>) target(%7 : memref<8x1024xf32, #tpu.memory_space<any>>) target_semaphore(%9 : memref<!tpu.dma_semaphore, #tpu.memory_space<semaphore_mem>>)
    %c0_i32_9 = arith.constant 0 : i32
    %c0_i32_10 = arith.constant 0 : i32
    %c0_i32_11 = arith.constant 0 : i32
    %c0_i32_12 = arith.constant 0 : i32
    %10 = tpu.memref_slice %arg0[%c0_i32_11, %c0_i32_12] : memref<16x1024xf32, #tpu.memory_space<any>> -> memref<8x1024xf32, #tpu.memory_space<any>>
    %c0_i32_13 = arith.constant 0 : i32
    %c0_i32_14 = arith.constant 0 : i32
    %11 = tpu.memref_slice %arg1[%c0_i32_9, %c0_i32_13, %c0_i32_14] : memref<2x8x1024xf32, #tpu.memory_space<any>> -> memref<1x8x1024xf32, #tpu.memory_space<any>>
    %12 = tpu.memref_squeeze %11 : memref<1x8x1024xf32, #tpu.memory_space<any>> -> memref<8x1024xf32, #tpu.memory_space<any>>
    %13 = tpu.memref_slice %arg2[%c0_i32_10] : memref<2x!tpu.dma_semaphore, #tpu.memory_space<semaphore_mem>> -> memref<1x!tpu.dma_semaphore, #tpu.memory_space<semaphore_mem>>
    %14 = tpu.memref_squeeze %13 : memref<1x!tpu.dma_semaphore, #tpu.memory_space<semaphore_mem>> -> memref<!tpu.dma_semaphore, #tpu.memory_space<semaphore_mem>>
    tpu.wait_dma2 semaphore(%14 : memref<!tpu.dma_semaphore, #tpu.memory_space<semaphore_mem>>) src(%10 : memref<8x1024xf32, #tpu.memory_space<any>>) dst(%12 : memref<8x1024xf32, #tpu.memory_space<any>>)
    %c1_i32_15 = arith.constant 1 : i32
    %c1_i32_16 = arith.constant 1 : i32
    %c8_i32_17 = arith.constant 8 : i32
    %c0_i32_18 = arith.constant 0 : i32
    %15 = tpu.memref_slice %arg0[%c8_i32_17, %c0_i32_18] : memref<16x1024xf32, #tpu.memory_space<any>> -> memref<8x1024xf32, #tpu.memory_space<any>>
    %c0_i32_19 = arith.constant 0 : i32
    %c0_i32_20 = arith.constant 0 : i32
    %16 = tpu.memref_slice %arg1[%c1_i32_15, %c0_i32_19, %c0_i32_20] : memref<2x8x1024xf32, #tpu.memory_space<any>> -> memref<1x8x1024xf32, #tpu.memory_space<any>>
    %17 = tpu.memref_squeeze %16 : memref<1x8x1024xf32, #tpu.memory_space<any>> -> memref<8x1024xf32, #tpu.memory_space<any>>
    %18 = tpu.memref_slice %arg2[%c1_i32_16] : memref<2x!tpu.dma_semaphore, #tpu.memory_space<semaphore_mem>> -> memref<1x!tpu.dma_semaphore, #tpu.memory_space<semaphore_mem>>
    %19 = tpu.memref_squeeze %18 : memref<1x!tpu.dma_semaphore, #tpu.memory_space<semaphore_mem>> -> memref<!tpu.dma_semaphore, #tpu.memory_space<semaphore_mem>>
    tpu.wait_dma2 semaphore(%19 : memref<!tpu.dma_semaphore, #tpu.memory_space<semaphore_mem>>) src(%15 : memref<8x1024xf32, #tpu.memory_space<any>>) dst(%17 : memref<8x1024xf32, #tpu.memory_space<any>>)
    return
  }
}

</mosaic_0001>

<llo_original>
// kernel: tpu_custom_call.1
$region0: #{tpu_custom_call.1}
  #allocation0 [shape = 'u32[]', space=smem, size = 0x4, offset = 0x4, fixed_abs, tag = 'smem constant byte address 0x4 - core index']
  #allocation1 [shape = 'u32[144,128]{1,0:T(1,128)}', space=vmem, size = 0x12000, scoped, tag = 'internal scratch']
  #allocation2 [shape = 's32[2]{0}', space=sflag, size = 0x8, scoped, tag = 'scratch operand']
  #allocation3 [shape = 's32[]', space=sflag, size = 0x4, offset = 0, fixed_abs, tag = 'sflag constant byte address 0x0 - dummy sync flag']
  #allocation4 [shape = 'u32[0]{0}', space=smem, size = 0, offset = 0, fixed_abs, tag = 'smem constant byte address 0x0 - null']
  #allocation5 [shape = 's32[]', space=sflag, size = 0x4, offset = 0, fixed_abs, tag = 'sflag constant byte address 0x0 - dummy sync flag']
  #allocation6 [shape = 'u32[0]{0}', space=smem, size = 0, offset = 0, fixed_abs, tag = 'smem constant byte address 0x0 - null']
  %s0 = inlined_call_operand.hbm [shape: f32[16,1024], index: 0, kind: input, shape index: {}]
  %s1 = inlined_call_operand.hbm [shape: f32[2,8,1024], index: 1, kind: output, shape index: {}]
  %s2 = sld [smem:[#allocation0]]
  $region2: #{tpu_custom_call.1} parent=0
    _
  %s4 = ssub.s32 1, %s2
  %s5 = scalar_select 0, %s4, %s2
  %s7 = sshll.u32 1, 14
  %s8 = sxor.u32 4294967295, %s7
  %12 = dma.general %s0, 1024, %s1, [#allocation2], 131072, [#allocation4], 0, 0
  %s13 = scalar_lea.hbm %s0, 1024
  %s14 = scalar_lea.hbm %s1, 1024
  %s15 = scalar_lea.sflag [#allocation2], 1
  %s17 = sshll.u32 1, 14
  %s18 = sxor.u32 4294967295, %s17
  %22 = dma.general %s13, 1024, %s14, %s15, 131072, [#allocation6], 0, 0
  %s23 = smul.u32 8, 1
  %s24 = smul.u32 %s23, 8
  %s25 = sshll.u32 %s24, 4
  %26 = dma.done [#allocation2], %s25
  %s27 = sshll.u32 %s24, 4
  %28 = dma.done %s15, %s27
  %29 = vsyncmov [#allocation2]
  %s30 = vpop.sfrf %29
  %p31 = scmp.eq.s32.totalorder %s30, 0
  %p32 = pneg %p31
  %34 = shalt.err (%p32)
  %s35 = scalar_lea.sflag [#allocation2], 1
  %36 = vsyncmov %s35
  %s37 = vpop.sfrf %36
  %p38 = scmp.eq.s32.totalorder %s37, 0
  %p39 = pneg %p38
  %41 = shalt.err (%p39)

</llo_original>
